<compile_context>
chip_gen: v6e
topology: v6e:2x2x1
jax: 0.10.0
libtpu: 0.0.40
codegen_flags: <defaults>
</compile_context>

<pallas_src>
import functools

import jax
import jax.numpy as jnp
from jax.experimental import pallas as pl
from jax.experimental.pallas import tpu as pltpu

S_DIM = 4        # state feature dim (fixed by the module)
HIDDEN = 32
OUT_DIM = 4
LANE = 128       # TPU lane width; features padded to this inside the kernel


def _round8(n):
    return ((n + 7) // 8) * 8


def init_params(key, num_actions, hidden=HIDDEN, out_dim=OUT_DIM):
    """Natural-shape params matching the PyTorch module: fc1/fc2 random,
    dyn_out zero-initialized. Weights stored as [in, out] (pre-transposed)."""
    input_dim = S_DIM + num_actions
    k1, k2, k3, k4 = jax.random.split(key, 4)
    w1 = jax.random.normal(k1, (input_dim, hidden), jnp.float32) * 0.1
    b1 = jax.random.normal(k2, (hidden,), jnp.float32) * 0.1
    w2 = jax.random.normal(k3, (hidden, hidden), jnp.float32) * 0.1
    b2 = jax.random.normal(k4, (hidden,), jnp.float32) * 0.1
    w3 = jnp.zeros((hidden, out_dim), jnp.float32)   # dyn_out zero-init (as in __init__)
    b3 = jnp.zeros((out_dim,), jnp.float32)
    return (w1, b1, w2, b2, w3, b3)


def pack_params(params, num_actions, hidden=HIDDEN, out_dim=OUT_DIM):
    """Pack all params into one (R, 128) f32 buffer, zero-padded so every
    in-kernel slice is lane-dense and 8-row aligned. Returns (buffer, offsets)."""
    w1, b1, w2, b2, w3, b3 = params
    A = num_actions
    rA = max(_round8(A), 8)
    o_w1s = 0                 # rows for state part of W1   (S_DIM used, 8 reserved)
    o_w1a = 8                 # rows for action part of W1  (A used, rA reserved)
    o_b1 = o_w1a + rA         # 1 row used, 8 reserved
    o_w2 = o_b1 + 8           # (LANE, LANE) block, real W2 in top-left (H, H)
    o_b2 = o_w2 + LANE
    o_w3 = o_b2 + 8           # (LANE, LANE) block, real W3 in top-left (H, out_dim)
    o_b3 = o_w3 + LANE
    rows = o_b3 + 8
    P = jnp.zeros((rows, LANE), jnp.float32)
    P = P.at[o_w1s:o_w1s + S_DIM, :hidden].set(w1[:S_DIM, :])
    P = P.at[o_w1a:o_w1a + A, :hidden].set(w1[S_DIM:, :])
    P = P.at[o_b1, :hidden].set(b1)
    P = P.at[o_w2:o_w2 + hidden, :hidden].set(w2)
    P = P.at[o_b2, :hidden].set(b2)
    P = P.at[o_w3:o_w3 + hidden, :out_dim].set(w3)
    P = P.at[o_b3, :out_dim].set(b3)
    offsets = (o_w1s, o_w1a, o_b1, o_w2, o_b2, o_w3, o_b3)
    return P, offsets


def _mlp_kernel(s_ref, a_ref, p_ref, o_ref, *, num_actions, offsets):
    o_w1s, o_w1a, o_b1, o_w2, o_b2, o_w3, o_b3 = offsets
    A = num_actions

    s = s_ref[...]                                          # (TM, 4)  f32
    a = a_ref[...]                                          # (TM, 1)  i32
    tm = s.shape[0]

    # fused one-hot(a): iota compare on the VPU (no host-side one_hot/concat)
    col = jax.lax.broadcasted_iota(jnp.int32, (tm, A), 1)
    one_hot = (col == a).astype(jnp.float32)                # (TM, A)

    # fc1 + ReLU  (x @ W1 split into state part + action part; K is tiny)
    # TODO(synk): could replace these K<=8 dots with VPU broadcast-FMAs to skip MXU padding.
    w1s = p_ref[o_w1s:o_w1s + S_DIM, :]                     # (4,   128)
    w1a = p_ref[o_w1a:o_w1a + A, :]                         # (A,   128)
    b1 = p_ref[o_b1:o_b1 + 1, :]                            # (1,   128)
    h1 = (jnp.dot(s, w1s, preferred_element_type=jnp.float32)
          + jnp.dot(one_hot, w1a, preferred_element_type=jnp.float32)
          + b1)
    h1 = jnp.maximum(h1, 0.0)                               # (TM, 128), cols >= H are 0

    # fc2 + ReLU (weights zero-padded to 128x128 -> fully lane-dense)
    w2 = p_ref[o_w2:o_w2 + LANE, :]                         # (128, 128)
    b2 = p_ref[o_b2:o_b2 + 1, :]
    h2 = jnp.maximum(jnp.dot(h1, w2, preferred_element_type=jnp.float32) + b2, 0.0)

    # dyn_out (zero-initialized in the module); lane-dense (TM, 128) store
    w3 = p_ref[o_w3:o_w3 + LANE, :]                         # (128, 128)
    b3 = p_ref[o_b3:o_b3 + 1, :]
    out = jnp.dot(h2, w3, preferred_element_type=jnp.float32) + b3
    o_ref[...] = out.astype(o_ref.dtype)


def dynamics_residual_forward(s, a, packed, offsets, num_actions, out_dim=OUT_DIM):
    """Forward pass equivalent to DynamicsResidual.forward(s, a).

    s: (B, 4) float32 state;  a: (B,) int actions;
    packed/offsets: from pack_params(...).
    """
    B = s.shape[0]
    tm = 512 if B >= 512 else _round8(B)          # batch tile (rows)
    padded_b = ((B + tm - 1) // tm) * tm

    s32 = s.astype(jnp.float32)
    a32 = a.astype(jnp.int32).reshape(B, 1)
    if padded_b != B:
        s32 = jnp.pad(s32, ((0, padded_b - B), (0, 0)))
        a32 = jnp.pad(a32, ((0, padded_b - B), (0, 0)))

    kernel = functools.partial(_mlp_kernel, num_actions=num_actions, offsets=offsets)

    out = pl.pallas_call(
        kernel,
        out_shape=jax.ShapeDtypeStruct((padded_b, LANE), jnp.float32),
        grid_spec=pltpu.PrefetchScalarGridSpec(
            num_scalar_prefetch=0,
            grid=(padded_b // tm,),
            in_specs=[
                pl.BlockSpec((tm, S_DIM), lambda i: (i, 0)),
                pl.BlockSpec((tm, 1), lambda i: (i, 0)),
                # single fat param DMA; constant index_map -> VMEM-resident
                pl.BlockSpec(packed.shape, lambda i: (0, 0)),
            ],
            out_specs=pl.BlockSpec((tm, LANE), lambda i: (i, 0)),
        ),
        compiler_params=pltpu.CompilerParams(
            dimension_semantics=("parallel",)),   # v7x: split batch across 2 TCs
    )(s32, a32, packed)
    return out[:B, :out_dim]


def _reference_forward(s, a, params, num_actions):
    w1, b1, w2, b2, w3, b3 = params
    one_hot = jax.nn.one_hot(a, num_actions, dtype=s.dtype)
    x = jnp.concatenate([s, one_hot], axis=1)
    h1 = jnp.maximum(x @ w1 + b1, 0.0)
    h2 = jnp.maximum(h1 @ w2 + b2, 0.0)
    return h2 @ w3 + b3


if __name__ == "__main__":
    num_actions = 4
    batch = 8

    key = jax.random.PRNGKey(0)
    ks, ka, kp, kz = jax.random.split(key, 4)
    s = jax.random.normal(ks, (batch, S_DIM), jnp.float32)
    a = jax.random.randint(ka, (batch,), 0, num_actions, jnp.int32)

    # 1) module-faithful init (dyn_out zero-initialized)
    params = init_params(kp, num_actions)
    packed, offsets = pack_params(params, num_actions)
    out = dynamics_residual_forward(s, a, packed, offsets, num_actions)
    out = jax.block_until_ready(out)
    ref = _reference_forward(s, a, params, num_actions)
    assert out.shape == (batch, OUT_DIM)
    assert jnp.allclose(out, ref, atol=1e-5), "mismatch vs reference (zero dyn_out)"

    # 2) same forward with a non-zero dyn_out to exercise the full matmul chain
    k5, k6 = jax.random.split(kz)
    w1, b1, w2, b2, _, _ = params
    w3 = jax.random.normal(k5, (HIDDEN, OUT_DIM), jnp.float32) * 0.1
    b3 = jax.random.normal(k6, (OUT_DIM,), jnp.float32) * 0.1
    params2 = (w1, b1, w2, b2, w3, b3)
    packed2, offsets2 = pack_params(params2, num_actions)
    out2 = jax.block_until_ready(
        dynamics_residual_forward(s, a, packed2, offsets2, num_actions))
    ref2 = _reference_forward(s, a, params2, num_actions)
    assert jnp.allclose(out2, ref2, atol=1e-5), "mismatch vs reference (random dyn_out)"

    print("KERNEL_OK")
</pallas_src>

<mosaic_0001>
module attributes {stable_mosaic.version = 11 : i64} {
  func.func @_mlp_kernel(%arg0: i32, %arg1: memref<8x4xf32, #tpu.memory_space<vmem>>, %arg2: memref<8x1xi32, #tpu.memory_space<vmem>>, %arg3: memref<296x128xf32, #tpu.memory_space<vmem>>, %arg4: memref<8x128xf32, #tpu.memory_space<vmem>>) attributes {dimension_semantics = [#tpu.dimension_semantics<parallel>], iteration_bounds = array<i64: 1>, scalar_prefetch = 0 : i64, scratch_operands = 0 : i64, tpu.core_type = #tpu.core_type<tc>, window_params = [{transform_indices = @transform_0, window_bounds = array<i64: 8, 4>}, {transform_indices = @transform_1, window_bounds = array<i64: 8, 1>}, {pipeline_mode = #tpu.pipeline_mode<synchronous>, transform_indices = @transform_2, window_bounds = array<i64: 296, 128>}, {transform_indices = @transform_3, window_bounds = array<i64: 8, 128>}]} {
    %c0 = arith.constant 0 : index
    %c0_0 = arith.constant 0 : index
    %0 = vector.load %arg1[%c0, %c0_0] : memref<8x4xf32, #tpu.memory_space<vmem>>, vector<8x4xf32>
    %c0_1 = arith.constant 0 : index
    %c0_2 = arith.constant 0 : index
    %1 = vector.load %arg2[%c0_1, %c0_2] : memref<8x1xi32, #tpu.memory_space<vmem>>, vector<8x1xi32>
    %2 = tpu.iota {dimensions = array<i32: 1>} : vector<8x4xi32>
    %3 = vector.broadcast %1 : vector<8x1xi32> to vector<8x4xi32>
    %4 = arith.cmpi eq, %2, %3 : vector<8x4xi32>
    %5 = arith.extui %4 : vector<8x4xi1> to vector<8x4xi32>
    %6 = arith.sitofp %5 : vector<8x4xi32> to vector<8x4xf32>
    %c0_3 = arith.constant 0 : index
    %c0_4 = arith.constant 0 : index
    %7 = vector.load %arg3[%c0_3, %c0_4] : memref<296x128xf32, #tpu.memory_space<vmem>>, vector<4x128xf32>
    %c8 = arith.constant 8 : index
    %c0_5 = arith.constant 0 : index
    %8 = vector.load %arg3[%c8, %c0_5] : memref<296x128xf32, #tpu.memory_space<vmem>>, vector<4x128xf32>
    %c16 = arith.constant 16 : index
    %c0_6 = arith.constant 0 : index
    %9 = vector.load %arg3[%c16, %c0_6] : memref<296x128xf32, #tpu.memory_space<vmem>>, vector<1x128xf32>
    %cst = arith.constant dense<0.000000e+00> : vector<8x128xf32>
    %10 = tpu.matmul %0, %7, %cst {dimension_numbers = #tpu.dot_dimension_numbers<[1], [0], [0], [1], [0, 0, 1, 1], [], []>} : vector<8x4xf32>, vector<4x128xf32>, vector<8x128xf32> -> vector<8x128xf32>
    %cst_7 = arith.constant dense<0.000000e+00> : vector<8x128xf32>
    %11 = tpu.matmul %6, %8, %cst_7 {dimension_numbers = #tpu.dot_dimension_numbers<[1], [0], [0], [1], [0, 0, 1, 1], [], []>} : vector<8x4xf32>, vector<4x128xf32>, vector<8x128xf32> -> vector<8x128xf32>
    %12 = arith.addf %10, %11 : vector<8x128xf32>
    %13 = vector.broadcast %9 : vector<1x128xf32> to vector<8x128xf32>
    %14 = arith.addf %12, %13 : vector<8x128xf32>
    %cst_8 = arith.constant 0.000000e+00 : f32
    %15 = vector.broadcast %cst_8 : f32 to vector<8x128xf32>
    %16 = arith.maximumf %14, %15 : vector<8x128xf32>
    %c24 = arith.constant 24 : index
    %c0_9 = arith.constant 0 : index
    %17 = vector.load %arg3[%c24, %c0_9] : memref<296x128xf32, #tpu.memory_space<vmem>>, vector<128x128xf32>
    %c152 = arith.constant 152 : index
    %c0_10 = arith.constant 0 : index
    %18 = vector.load %arg3[%c152, %c0_10] : memref<296x128xf32, #tpu.memory_space<vmem>>, vector<1x128xf32>
    %cst_11 = arith.constant dense<0.000000e+00> : vector<8x128xf32>
    %19 = tpu.matmul %16, %17, %cst_11 {dimension_numbers = #tpu.dot_dimension_numbers<[1], [0], [0], [1], [0, 0, 1, 1], [], []>} : vector<8x128xf32>, vector<128x128xf32>, vector<8x128xf32> -> vector<8x128xf32>
    %20 = vector.broadcast %18 : vector<1x128xf32> to vector<8x128xf32>
    %21 = arith.addf %19, %20 : vector<8x128xf32>
    %cst_12 = arith.constant 0.000000e+00 : f32
    %22 = vector.broadcast %cst_12 : f32 to vector<8x128xf32>
    %23 = arith.maximumf %21, %22 : vector<8x128xf32>
    %c160 = arith.constant 160 : index
    %c0_13 = arith.constant 0 : index
    %24 = vector.load %arg3[%c160, %c0_13] : memref<296x128xf32, #tpu.memory_space<vmem>>, vector<128x128xf32>
    %c288 = arith.constant 288 : index
    %c0_14 = arith.constant 0 : index
    %25 = vector.load %arg3[%c288, %c0_14] : memref<296x128xf32, #tpu.memory_space<vmem>>, vector<1x128xf32>
    %cst_15 = arith.constant dense<0.000000e+00> : vector<8x128xf32>
    %26 = tpu.matmul %23, %24, %cst_15 {dimension_numbers = #tpu.dot_dimension_numbers<[1], [0], [0], [1], [0, 0, 1, 1], [], []>} : vector<8x128xf32>, vector<128x128xf32>, vector<8x128xf32> -> vector<8x128xf32>
    %27 = vector.broadcast %25 : vector<1x128xf32> to vector<8x128xf32>
    %28 = arith.addf %26, %27 : vector<8x128xf32>
    %c0_16 = arith.constant 0 : index
    %c0_17 = arith.constant 0 : index
    %29 = vector.load %arg4[%c0_16, %c0_17] : memref<8x128xf32, #tpu.memory_space<vmem>>, vector<8x128xf32>
    tpu.vector_store %arg4[%c0_16, %c0_17], %28 {strides = array<i32>} : memref<8x128xf32, #tpu.memory_space<vmem>>, vector<8x128xf32>,
    return
  }
  func.func @transform_0(%arg0: i32) -> (i32, i32) {
    %c0_i32 = arith.constant 0 : i32
    %c0_i32_0 = arith.constant 0 : i32
    return %arg0, %c0_i32 : i32, i32
  }
  func.func @transform_1(%arg0: i32) -> (i32, i32) {
    %c0_i32 = arith.constant 0 : i32
    %c0_i32_0 = arith.constant 0 : i32
    return %arg0, %c0_i32 : i32, i32
  }
  func.func @transform_2(%arg0: i32) -> (i32, i32) {
    %c0_i32 = arith.constant 0 : i32
    %c0_i32_0 = arith.constant 0 : i32
    %c0_i32_1 = arith.constant 0 : i32
    return %c0_i32, %c0_i32_0 : i32, i32
  }
  func.func @transform_3(%arg0: i32) -> (i32, i32) {
    %c0_i32 = arith.constant 0 : i32
    %c0_i32_0 = arith.constant 0 : i32
    return %arg0, %c0_i32 : i32, i32
  }
}

</mosaic_0001>

<llo_original>
// kernel: tpu_custom_call.1
$region0: #{tpu_custom_call.1}
  #allocation0 [shape = 'u32[]', space=smem, size = 0x4, offset = 0x4, fixed_abs, tag = 'smem constant byte address 0x4 - core index']
  #allocation1 [shape = 'u32[144,128]{1,0:T(1,128)}', space=vmem, size = 0x12000, scoped, tag = 'internal scratch']
  %s0 = inlined_call_operand.vmem [shape: f32[8,4], index: 0, kind: input, shape index: {}]
  %s1 = inlined_call_operand.vmem [shape: s32[8,1], index: 1, kind: input, shape index: {}]
  %s2 = inlined_call_operand.hbm [shape: f32[296,128], index: 2, kind: input, shape index: {}]
  %s3 = inlined_call_operand.hbm [shape: f32[8,128], index: 3, kind: output, shape index: {}]
  %s4 = sld [smem:[#allocation0]]
  $region26: #{tpu_custom_call.1} parent=0
    _
  %s6 = ssub.s32 1, %s4
  %s7 = scalar_select 0, %s6, %s4
  $region1: #{tpu_custom_call.1} parent=0
    #allocation2 [shape = 'u8[151552]{0}', space=vmem, size = 0x25000, scoped, tag = 'input window, operand 2, single buffered']
    #allocation3 [shape = 's32[1]{0}', space=sflag, size = 0x4, scoped, tag = 'scoped memory for tpu_custom_call.1']
    #allocation4 [shape = 's32[1]{0}', space=sflag, size = 0x4, scoped, tag = 'scoped memory for tpu_custom_call.1']
    #allocation5 [shape = 'u8[4096]{0}', space=vmem, size = 0x1000, scoped, tag = 'output window, operand 0, single buffered']
    %8 = vsyncpa [#allocation3], 0
    %9 = vsyncpa [#allocation4], 0
    // Predicated region
    $region2: #{tpu_custom_call.1} parent=1 // pred_check
      _
    $region3: #{tpu_custom_call.1} parent=1 // pred_check_branch
      %11 = sbr.rel (0) target = $region5
    $region4: #{tpu_custom_call.1} parent=1 // pred_region
      _
    $region5: #{tpu_custom_call.1} parent=1 // pred_fallthru
      _
    // Predicated region
    $region6: #{tpu_custom_call.1} parent=1 // pred_check
      _
    $region7: #{tpu_custom_call.1} parent=1 // pred_check_branch
      %13 = sbr.rel (0) target = $region9
    $region8: #{tpu_custom_call.1} parent=1 // pred_region
      _
    $region9: #{tpu_custom_call.1} parent=1 // pred_fallthru
      _
    // Predicated region
    $region10: #{tpu_custom_call.1} parent=1 // pred_check
      _
    $region11: #{tpu_custom_call.1} parent=1 // pred_check_branch
      %15 = sbr.rel (0) target = $region13
    $region12: #{tpu_custom_call.1} parent=1 // pred_region
      %s17 = ssub.s32 4736, 4736
      %18 = vsyncadd [#allocation3], %s17
      %s19 = sshll.u32 [#allocation2], 4
      %s20 = int_to_ptr.vmem [resolvable:$true] %s19
      %25 = dma.hbm_to_vmem [thread:$0]  %s2, 4736, %s20, [#allocation3], 128, 128, 8
    $region13: #{tpu_custom_call.1} parent=1 // pred_fallthru
      _
    // Predicated region
    $region14: #{tpu_custom_call.1} parent=1 // pred_check
      _
    $region15: #{tpu_custom_call.1} parent=1 // pred_check_branch
      %27 = sbr.rel (0) target = $region17
    $region16: #{tpu_custom_call.1} parent=1 // pred_region
      %28 = dma.done [#allocation3], 4736
    $region17: #{tpu_custom_call.1} parent=1 // pred_fallthru
      _
    %v29 = vld [vmem:[%s0] sm:$0xff]
    %v30 = vld [vmem:[%s1] sm:$0xff]
    %v31 = vlaneseq
    %v32 = vand.u32 %v31, 127
    %33 = vset.pattern.permute.xlu0 0
    %34 = vperm.xlu0 %33, %v30
    %v35 = vpop.permute.xlu0 %34
    %vm36 = vcmp.eq.s32.totalorder %v32, %v35
    %v37 = vsel %vm36, 1, 0
    %v38 = vcvt.s32.f32 %v37
    %v39 = vld [vmem:[#allocation2] sm:$0xf]
    %v40 = vld [vmem:[#allocation2 + $0x8] sm:$0xf]
    %v41 = vld [vmem:[#allocation2 + $0x10] sm:$0x1]
    %vm42 = vcmask 31744
    %v44 = vsel %vm42, %v38, 0
    %vm46 = vcmask 1043456
    %v48 = vsel %vm46, %v40, 0
    %50 = vmatprep.subr.mxu0 0.0
    %51 = vmatpush1.msra.mxu0 0.0
    %52 = vmatprep.subr.mxu0 0.0
    %53 = vmatpush1.msra.mxu0 0.0
    %54 = vmatprep.subr.mxu0 0.0
    %55 = vmatpush1.msra.mxu0 0.0
    %56 = vmatprep.subr.mxu0 0.0
    %57 = vmatpush1.msra.mxu0 0.0
    %58 = vmatprep.subr.mxu0 0.0
    %59 = vmatpush1.msra.mxu0 0.0
    %60 = vmatprep.subr.mxu0 0.0
    %61 = vmatpush1.msra.mxu0 0.0
    %62 = vmatprep.subr.mxu0 0.0
    %63 = vmatpush1.msra.mxu0 0.0
    %64 = vmatprep.subr.mxu0 0.0
    %65 = vmatpush1.msra.mxu0 0.0
    %66 = vmatprep.subr.mxu0 0.0
    %67 = vmatpush1.msra.mxu0 0.0
    %68 = vmatprep.subr.mxu0 0.0
    %69 = vmatpush1.msra.mxu0 0.0
    %70 = vmatprep.subr.mxu0 0.0
    %71 = vmatpush1.msra.mxu0 0.0
    %72 = vmatprep.subr.mxu0 0.0
    %73 = vmatpush1.msra.mxu0 0.0
    %74 = vmatprep.subr.mxu0 0.0
    %75 = vmatpush1.msra.mxu0 0.0
    %76 = vmatprep.subr.mxu0 0.0
    %77 = vmatpush1.msra.mxu0 0.0
    %78 = vmatprep.subr.mxu0 0.0
    %79 = vmatpush1.msra.mxu0 0.0
    %80 = vmatprep.subr.mxu0 0.0
    %81 = vmatpush1.msra.mxu0 %v48
    %82 = vmatprep.subr.mxu0 0.0
    %83 = vmatpush2.msra.mxu0 0.0
    %84 = vmatprep.subr.mxu0 0.0
    %85 = vmatpush2.msra.mxu0 0.0
    %86 = vmatprep.subr.mxu0 0.0
    %87 = vmatpush2.msra.mxu0 0.0
    %88 = vmatprep.subr.mxu0 0.0
    %89 = vmatpush2.msra.mxu0 0.0
    %90 = vmatprep.subr.mxu0 0.0
    %91 = vmatpush2.msra.mxu0 0.0
    %92 = vmatprep.subr.mxu0 0.0
    %93 = vmatpush2.msra.mxu0 0.0
    %94 = vmatprep.subr.mxu0 0.0
    %95 = vmatpush2.msra.mxu0 0.0
    %96 = vmatprep.subr.mxu0 0.0
    %97 = vmatpush2.msra.mxu0 0.0
    %98 = vmatprep.subr.mxu0 0.0
    %99 = vmatpush2.msra.mxu0 0.0
    %100 = vmatprep.subr.mxu0 0.0
    %101 = vmatpush2.msra.mxu0 0.0
    %102 = vmatprep.subr.mxu0 0.0
    %103 = vmatpush2.msra.mxu0 0.0
    %104 = vmatprep.subr.mxu0 0.0
    %105 = vmatpush2.msra.mxu0 0.0
    %106 = vmatprep.subr.mxu0 0.0
    %107 = vmatpush2.msra.mxu0 0.0
    %108 = vmatprep.subr.mxu0 0.0
    %109 = vmatpush2.msra.mxu0 0.0
    %110 = vmatprep.subr.mxu0 0.0
    %111 = vmatpush2.msra.mxu0 0.0
    %112 = vmatprep.subr.mxu0 0.0
    %113 = vmatpush2.msra.mxu0 0.0
    %114 = vmatprep.mubr.f32.mxu0 0.0
    %115 = vmatmul.mubr.f32.gmra.mxu0 %v44
    %v116 = vpop.f32.mrf.mxu0
    %v117 = vadd.f32 0.0, %v116
    %v118 = vpop.f32.mrf.mxu0
    %119 = vdwg.mxu0
    %v121 = vsel %vm42, %v29, 0
    %v124 = vsel %vm46, %v39, 0
    %126 = vmatprep.subr.mxu0 0.0
    %127 = vmatpush1.msra.mxu0 0.0
    %128 = vmatprep.subr.mxu0 0.0
    %129 = vmatpush1.msra.mxu0 0.0
    %130 = vmatprep.subr.mxu0 0.0
    %131 = vmatpush1.msra.mxu0 0.0
    %132 = vmatprep.subr.mxu0 0.0
    %133 = vmatpush1.msra.mxu0 0.0
    %134 = vmatprep.subr.mxu0 0.0
    %135 = vmatpush1.msra.mxu0 0.0
    %136 = vmatprep.subr.mxu0 0.0
    %137 = vmatpush1.msra.mxu0 0.0
    %138 = vmatprep.subr.mxu0 0.0
    %139 = vmatpush1.msra.mxu0 0.0
    %140 = vmatprep.subr.mxu0 0.0
    %141 = vmatpush1.msra.mxu0 0.0
    %142 = vmatprep.subr.mxu0 0.0
    %143 = vmatpush1.msra.mxu0 0.0
    %144 = vmatprep.subr.mxu0 0.0
    %145 = vmatpush1.msra.mxu0 0.0
    %146 = vmatprep.subr.mxu0 0.0
    %147 = vmatpush1.msra.mxu0 0.0
    %148 = vmatprep.subr.mxu0 0.0
    %149 = vmatpush1.msra.mxu0 0.0
    %150 = vmatprep.subr.mxu0 0.0
    %151 = vmatpush1.msra.mxu0 0.0
    %152 = vmatprep.subr.mxu0 0.0
    %153 = vmatpush1.msra.mxu0 0.0
    %154 = vmatprep.subr.mxu0 0.0
    %155 = vmatpush1.msra.mxu0 0.0
    %156 = vmatprep.subr.mxu0 0.0
    %157 = vmatpush1.msra.mxu0 %v124
    %158 = vmatprep.subr.mxu0 0.0
    %159 = vmatpush2.msra.mxu0 0.0
    %160 = vmatprep.subr.mxu0 0.0
    %161 = vmatpush2.msra.mxu0 0.0
    %162 = vmatprep.subr.mxu0 0.0
    %163 = vmatpush2.msra.mxu0 0.0
    %164 = vmatprep.subr.mxu0 0.0
    %165 = vmatpush2.msra.mxu0 0.0
    %166 = vmatprep.subr.mxu0 0.0
    %167 = vmatpush2.msra.mxu0 0.0
    %168 = vmatprep.subr.mxu0 0.0
    %169 = vmatpush2.msra.mxu0 0.0
    %170 = vmatprep.subr.mxu0 0.0
    %171 = vmatpush2.msra.mxu0 0.0
    %172 = vmatprep.subr.mxu0 0.0
    %173 = vmatpush2.msra.mxu0 0.0
    %174 = vmatprep.subr.mxu0 0.0
    %175 = vmatpush2.msra.mxu0 0.0
    %176 = vmatprep.subr.mxu0 0.0
    %177 = vmatpush2.msra.mxu0 0.0
    %178 = vmatprep.subr.mxu0 0.0
    %179 = vmatpush2.msra.mxu0 0.0
    %180 = vmatprep.subr.mxu0 0.0
    %181 = vmatpush2.msra.mxu0 0.0
    %182 = vmatprep.subr.mxu0 0.0
    %183 = vmatpush2.msra.mxu0 0.0
    %184 = vmatprep.subr.mxu0 0.0
    %185 = vmatpush2.msra.mxu0 0.0
    %186 = vmatprep.subr.mxu0 0.0
    %187 = vmatpush2.msra.mxu0 0.0
    %188 = vmatprep.subr.mxu0 0.0
    %189 = vmatpush2.msra.mxu0 0.0
    %190 = vmatprep.mubr.f32.mxu0 0.0
    %191 = vmatmul.mubr.f32.gmra.mxu0 %v121
    %v192 = vpop.f32.mrf.mxu0
    %v193 = vadd.f32 %v117, %v192
    %v194 = vpop.f32.mrf.mxu0
    %195 = vdwg.mxu0
    %v196 = vlaneseq
    %v197 = vshrl.u32 %v196, 7
    %v198 = vsub.s32 0, %v197
    %v199 = vrot.slane %v41, %v198
    %v200 = vadd.f32 %v193, %v199
    %v201 = vmax.f32 %v200, 0.0
    %v202 = vld [vmem:[#allocation2 + $0x18] sm:$0xff]
    %v203 = vld [vmem:[#allocation2 + $0x20] sm:$0xff]
    %v204 = vld [vmem:[#allocation2 + $0x28] sm:$0xff]
    %v205 = vld [vmem:[#allocation2 + $0x30] sm:$0xff]
    %v206 = vld [vmem:[#allocation2 + $0x38] sm:$0xff]
    %v207 = vld [vmem:[#allocation2 + $0x40] sm:$0xff]
    %v208 = vld [vmem:[#allocation2 + $0x48] sm:$0xff]
    %v209 = vld [vmem:[#allocation2 + $0x50] sm:$0xff]
    %v210 = vld [vmem:[#allocation2 + $0x58] sm:$0xff]
    %v211 = vld [vmem:[#allocation2 + $0x60] sm:$0xff]
    %v212 = vld [vmem:[#allocation2 + $0x68] sm:$0xff]
    %v213 = vld [vmem:[#allocation2 + $0x70] sm:$0xff]
    %v214 = vld [vmem:[#allocation2 + $0x78] sm:$0xff]
    %v215 = vld [vmem:[#allocation2 + $0x80] sm:$0xff]
    %v216 = vld [vmem:[#allocation2 + $0x88] sm:$0xff]
    %v217 = vld [vmem:[#allocation2 + $0x90] sm:$0xff]
    %v218 = vld [vmem:[#allocation2 + $0x98] sm:$0x1]
    %v219 = vlaneseq
    %v220 = vshrl.u32 %v219, 7
    %v221 = vsub.s32 0, %v220
    %v222 = vrot.slane %v218, %v221
    %223 = vmatprep.subr.mxu0 0.0
    %224 = vmatpush1.msra.mxu0 %v217
    %225 = vmatprep.subr.mxu0 0.0
    %226 = vmatpush1.msra.mxu0 %v216
    %227 = vmatprep.subr.mxu0 0.0
    %228 = vmatpush1.msra.mxu0 %v215
    %229 = vmatprep.subr.mxu0 0.0
    %230 = vmatpush1.msra.mxu0 %v214
    %231 = vmatprep.subr.mxu0 0.0
    %232 = vmatpush1.msra.mxu0 %v213
    %233 = vmatprep.subr.mxu0 0.0
    %234 = vmatpush1.msra.mxu0 %v212
    %235 = vmatprep.subr.mxu0 0.0
    %236 = vmatpush1.msra.mxu0 %v211
    %237 = vmatprep.subr.mxu0 0.0
    %238 = vmatpush1.msra.mxu0 %v210
    %239 = vmatprep.subr.mxu0 0.0
    %240 = vmatpush1.msra.mxu0 %v209
    %241 = vmatprep.subr.mxu0 0.0
    %242 = vmatpush1.msra.mxu0 %v208
    %243 = vmatprep.subr.mxu0 0.0
    %244 = vmatpush1.msra.mxu0 %v207
    %245 = vmatprep.subr.mxu0 0.0
    %246 = vmatpush1.msra.mxu0 %v206
    %247 = vmatprep.subr.mxu0 0.0
    %248 = vmatpush1.msra.mxu0 %v205
    %249 = vmatprep.subr.mxu0 0.0
    %250 = vmatpush1.msra.mxu0 %v204
    %251 = vmatprep.subr.mxu0 0.0
    %252 = vmatpush1.msra.mxu0 %v203
    %253 = vmatprep.subr.mxu0 0.0
    %254 = vmatpush1.msra.mxu0 %v202
    %255 = vmatprep.subr.mxu0 0.0
    %256 = vmatpush2.msra.mxu0 0.0
    %257 = vmatprep.subr.mxu0 0.0
    %258 = vmatpush2.msra.mxu0 0.0
    %259 = vmatprep.subr.mxu0 0.0
    %260 = vmatpush2.msra.mxu0 0.0
    %261 = vmatprep.subr.mxu0 0.0
    %262 = vmatpush2.msra.mxu0 0.0
    %263 = vmatprep.subr.mxu0 0.0
    %264 = vmatpush2.msra.mxu0 0.0
    %265 = vmatprep.subr.mxu0 0.0
    %266 = vmatpush2.msra.mxu0 0.0
    %267 = vmatprep.subr.mxu0 0.0
    %268 = vmatpush2.msra.mxu0 0.0
    %269 = vmatprep.subr.mxu0 0.0
    %270 = vmatpush2.msra.mxu0 0.0
    %271 = vmatprep.subr.mxu0 0.0
    %272 = vmatpush2.msra.mxu0 0.0
    %273 = vmatprep.subr.mxu0 0.0
    %274 = vmatpush2.msra.mxu0 0.0
    %275 = vmatprep.subr.mxu0 0.0
    %276 = vmatpush2.msra.mxu0 0.0
    %277 = vmatprep.subr.mxu0 0.0
    %278 = vmatpush2.msra.mxu0 0.0
    %279 = vmatprep.subr.mxu0 0.0
    %280 = vmatpush2.msra.mxu0 0.0
    %281 = vmatprep.subr.mxu0 0.0
    %282 = vmatpush2.msra.mxu0 0.0
    %283 = vmatprep.subr.mxu0 0.0
    %284 = vmatpush2.msra.mxu0 0.0
    %285 = vmatprep.subr.mxu0 0.0
    %286 = vmatpush2.msra.mxu0 0.0
    %287 = vmatprep.mubr.f32.mxu0 0.0
    %288 = vmatmul.mubr.f32.gmra.mxu0 %v201
    %v289 = vpop.f32.mrf.mxu0
    %v290 = vadd.f32 %v222, %v289
    %v291 = vpop.f32.mrf.mxu0
    %292 = vdwg.mxu0
    %v293 = vmax.f32 %v290, 0.0
    %v294 = vld [vmem:[#allocation2 + $0xa0] sm:$0xff]
    %v295 = vld [vmem:[#allocation2 + $0xa8] sm:$0xff]
    %v296 = vld [vmem:[#allocation2 + $0xb0] sm:$0xff]
    %v297 = vld [vmem:[#allocation2 + $0xb8] sm:$0xff]
    %v298 = vld [vmem:[#allocation2 + $0xc0] sm:$0xff]
    %v299 = vld [vmem:[#allocation2 + $0xc8] sm:$0xff]
    %v300 = vld [vmem:[#allocation2 + $0xd0] sm:$0xff]
    %v301 = vld [vmem:[#allocation2 + $0xd8] sm:$0xff]
    %v302 = vld [vmem:[#allocation2 + $0xe0] sm:$0xff]
    %v303 = vld [vmem:[#allocation2 + $0xe8] sm:$0xff]
    %v304 = vld [vmem:[#allocation2 + $0xf0] sm:$0xff]
    %v305 = vld [vmem:[#allocation2 + $0xf8] sm:$0xff]
    %v306 = vld [vmem:[#allocation2 + $0x100] sm:$0xff]
    %v307 = vld [vmem:[#allocation2 + $0x108] sm:$0xff]
    %v308 = vld [vmem:[#allocation2 + $0x110] sm:$0xff]
    %v309 = vld [vmem:[#allocation2 + $0x118] sm:$0xff]
    %v310 = vld [vmem:[#allocation2 + $0x120] sm:$0x1]
    %v311 = vlaneseq
    %v312 = vshrl.u32 %v311, 7
    %v313 = vsub.s32 0, %v312
    %v314 = vrot.slane %v310, %v313
    %315 = vmatprep.subr.mxu0 0.0
    %316 = vmatpush1.msra.mxu0 %v309
    %317 = vmatprep.subr.mxu0 0.0
    %318 = vmatpush1.msra.mxu0 %v308
    %319 = vmatprep.subr.mxu0 0.0
    %320 = vmatpush1.msra.mxu0 %v307
    %321 = vmatprep.subr.mxu0 0.0
    %322 = vmatpush1.msra.mxu0 %v306
    %323 = vmatprep.subr.mxu0 0.0
    %324 = vmatpush1.msra.mxu0 %v305
    %325 = vmatprep.subr.mxu0 0.0
    %326 = vmatpush1.msra.mxu0 %v304
    %327 = vmatprep.subr.mxu0 0.0
    %328 = vmatpush1.msra.mxu0 %v303
    %329 = vmatprep.subr.mxu0 0.0
    %330 = vmatpush1.msra.mxu0 %v302
    %331 = vmatprep.subr.mxu0 0.0
    %332 = vmatpush1.msra.mxu0 %v301
    %333 = vmatprep.subr.mxu0 0.0
    %334 = vmatpush1.msra.mxu0 %v300
    %335 = vmatprep.subr.mxu0 0.0
    %336 = vmatpush1.msra.mxu0 %v299
    %337 = vmatprep.subr.mxu0 0.0
    %338 = vmatpush1.msra.mxu0 %v298
    %339 = vmatprep.subr.mxu0 0.0
    %340 = vmatpush1.msra.mxu0 %v297
    %341 = vmatprep.subr.mxu0 0.0
    %342 = vmatpush1.msra.mxu0 %v296
    %343 = vmatprep.subr.mxu0 0.0
    %344 = vmatpush1.msra.mxu0 %v295
    %345 = vmatprep.subr.mxu0 0.0
    %346 = vmatpush1.msra.mxu0 %v294
    %347 = vmatprep.subr.mxu0 0.0
    %348 = vmatpush2.msra.mxu0 0.0
    %349 = vmatprep.subr.mxu0 0.0
    %350 = vmatpush2.msra.mxu0 0.0
    %351 = vmatprep.subr.mxu0 0.0
    %352 = vmatpush2.msra.mxu0 0.0
    %353 = vmatprep.subr.mxu0 0.0
    %354 = vmatpush2.msra.mxu0 0.0
    %355 = vmatprep.subr.mxu0 0.0
    %356 = vmatpush2.msra.mxu0 0.0
    %357 = vmatprep.subr.mxu0 0.0
    %358 = vmatpush2.msra.mxu0 0.0
    %359 = vmatprep.subr.mxu0 0.0
    %360 = vmatpush2.msra.mxu0 0.0
    %361 = vmatprep.subr.mxu0 0.0
    %362 = vmatpush2.msra.mxu0 0.0
    %363 = vmatprep.subr.mxu0 0.0
    %364 = vmatpush2.msra.mxu0 0.0
    %365 = vmatprep.subr.mxu0 0.0
    %366 = vmatpush2.msra.mxu0 0.0
    %367 = vmatprep.subr.mxu0 0.0
    %368 = vmatpush2.msra.mxu0 0.0
    %369 = vmatprep.subr.mxu0 0.0
    %370 = vmatpush2.msra.mxu0 0.0
    %371 = vmatprep.subr.mxu0 0.0
    %372 = vmatpush2.msra.mxu0 0.0
    %373 = vmatprep.subr.mxu0 0.0
    %374 = vmatpush2.msra.mxu0 0.0
    %375 = vmatprep.subr.mxu0 0.0
    %376 = vmatpush2.msra.mxu0 0.0
    %377 = vmatprep.subr.mxu0 0.0
    %378 = vmatpush2.msra.mxu0 0.0
    %379 = vmatprep.mubr.f32.mxu0 0.0
    %380 = vmatmul.mubr.f32.gmra.mxu0 %v293
    %v381 = vpop.f32.mrf.mxu0
    %v382 = vadd.f32 %v314, %v381
    %v383 = vpop.f32.mrf.mxu0
    %384 = vdwg.mxu0
    %385 = vst [vmem:[#allocation5] sm:$0xff] %v382
    // Predicated region
    $region18: #{tpu_custom_call.1} parent=1 // pred_check
      _
    $region19: #{tpu_custom_call.1} parent=1 // pred_check_branch
      %387 = sbr.rel (0) target = $region21
    $region20: #{tpu_custom_call.1} parent=1 // pred_region
      %s389 = ssub.s32 128, 128
      %390 = vsyncadd [#allocation4], %s389
      %s392 = sshll.u32 [#allocation5], 4
      %s393 = int_to_ptr.vmem [resolvable:$true] %s392
      %395 = dma.vmem_to_hbm [thread:$0]  %s393, 128, %s3, [#allocation4]
    $region21: #{tpu_custom_call.1} parent=1 // pred_fallthru
      _
    // Predicated region
    $region22: #{tpu_custom_call.1} parent=1 // pred_check
      _
    $region23: #{tpu_custom_call.1} parent=1 // pred_check_branch
      %397 = sbr.rel (0) target = $region25
    $region24: #{tpu_custom_call.1} parent=1 // pred_region
      %398 = dma.done [#allocation4], 128
    $region25: #{tpu_custom_call.1} parent=1 // pred_fallthru
      _
    %399 = vsyncpa [#allocation3], 1
    %400 = vsyncpa [#allocation4], 1

</llo_original>
